<compile_context>
chip_gen: v5e
topology: v5e:2x2
jax: 0.10.0
libtpu: 0.0.40
codegen_flags: <defaults>
</compile_context>

<pallas_src>
import functools

import jax
import jax.numpy as jnp
from jax import lax
from jax.experimental import pallas as pl
from jax.experimental.pallas import tpu as pltpu


# ---------------------------------------------------------------------------
# Shared excitation MLP: sigmoid(relu(p @ W1^T + b1) @ W2^T + b2), rows = batch.
# ---------------------------------------------------------------------------
def _excite(pooled_f32, w1_ref, b1_ref, w2_ref, b2_ref, out_dtype):
    # pooled_f32: (M, C) f32 means; w1_ref: (B, C); b1_ref: (1, B);
    # w2_ref: (C, B); b2_ref: (1, C).  Contract lhs dim 1 with rhs dim 1 so the
    # conv weights are used in their native (out, in) layout (no transposes).
    dn = (((1,), (1,)), ((), ()))
    h = lax.dot_general(pooled_f32, w1_ref[...].astype(jnp.float32), dn,
                        preferred_element_type=jnp.float32)
    h = jnp.maximum(h + b1_ref[...].astype(jnp.float32), 0.0)            # (M, B)
    s = lax.dot_general(h, w2_ref[...].astype(jnp.float32), dn,
                        preferred_element_type=jnp.float32)
    s = s + b2_ref[...].astype(jnp.float32)                              # (M, C)
    return jax.nn.sigmoid(s).astype(out_dtype)


# ---------------------------------------------------------------------------
# Fused path: pool + excite + scale on one resident (1, C, L) tile, grid=(N,).
# ---------------------------------------------------------------------------
def fused_se_kernel(x_ref, w1_ref, b1_ref, w2_ref, b2_ref, o_ref, *, inv_len):
    # x_ref / o_ref: (1, C, L).  Weight blocks have constant index_maps, so
    # their DMAs are not re-issued per grid step.
    pooled = jnp.sum(x_ref[...], axis=2, dtype=jnp.float32) * inv_len    # (1, C)
    s = _excite(pooled, w1_ref, b1_ref, w2_ref, b2_ref, o_ref.dtype)     # (1, C)
    o_ref[...] = x_ref[...] * s[:, :, None]


# ---------------------------------------------------------------------------
# Two-pass path, pass 1: streamed pooling with the MLP fused into the finalize.
# ---------------------------------------------------------------------------
def pool_excite_kernel(x_ref, w1_ref, b1_ref, w2_ref, b2_ref, s_ref, acc_ref,
                       *, inv_len):
    # x_ref: (1, C, Lt); s_ref: (1, C, 1) in x.dtype; acc_ref: (1, C, 1) f32.
    l = pl.program_id(1)

    @pl.when(l == 0)
    def _():
        acc_ref[...] = jnp.zeros_like(acc_ref)

    # f32 accumulation without a separate full-tile f32 copy.
    acc_ref[...] += jnp.sum(x_ref[...], axis=2, keepdims=True, dtype=jnp.float32)

    @pl.when(l == pl.num_programs(1) - 1)
    def _():
        pooled = acc_ref[...][:, :, 0] * inv_len                         # (1, C)
        s = _excite(pooled, w1_ref, b1_ref, w2_ref, b2_ref, s_ref.dtype)
        s_ref[...] = s[:, :, None]                                       # (1, C, 1)


# ---------------------------------------------------------------------------
# Two-pass path, pass 2: scale x by s; output L tile is lane-dense, no casts.
# ---------------------------------------------------------------------------
def scale_kernel(x_ref, s_ref, o_ref):
    # x_ref: (1, C, Lt); s_ref: (1, C, 1) already in x.dtype; o_ref: (1, C, Lt).
    o_ref[...] = x_ref[...] * s_ref[...]


# ---------------------------------------------------------------------------
# Generation-aware sizing helpers.
# ---------------------------------------------------------------------------
def _device_vmem_bytes():
    try:
        return int(pltpu.get_tpu_info().vmem_capacity_bytes)
    except Exception:
        return 64 * 1024 * 1024  # conservative: v7x per-TensorCore VMEM


def _pick_l_tile(L, C, itemsize, block_budget):
    """Largest multiple-of-128 divisor of L whose (C, Lt) block, double-buffered
    for input and output (4x), stays under block_budget.  Any multiple of 128 is
    accepted (not just powers of two) so awkward L keeps the pipeline alive."""
    best = None
    lt = 128
    while lt <= L:
        if L % lt == 0 and 4 * C * lt * itemsize <= block_budget:
            best = lt
        lt += 128
    return best


# ---------------------------------------------------------------------------
# Wrapper.
# ---------------------------------------------------------------------------
def se_module(x, w1, b1, w2, b2, *, force_two_pass=False, l_tile=None):
    """x: (N, C, L); w1: (B, C); b1: (B,); w2: (C, B); b2: (C,) -> (N, C, L)."""
    N, C, L = x.shape
    B = w1.shape[0]
    itemsize = jnp.dtype(x.dtype).itemsize
    inv_len = 1.0 / L

    b1r = b1.reshape(1, B)
    b2r = b2.reshape(1, C)

    # Weight VMEM footprint (x2 for the default double buffering of each block).
    w_bytes = 2 * (w1.size * jnp.dtype(w1.dtype).itemsize
                   + w2.size * jnp.dtype(w2.dtype).itemsize
                   + b1r.size * jnp.dtype(b1.dtype).itemsize
                   + b2r.size * jnp.dtype(b2.dtype).itemsize)

    # ~48 MiB usable on v7x (64 MiB physical), ~96 MiB on v5e/v6e (128 MiB).
    vmem_budget = (_device_vmem_bytes() * 3) // 4
    cparams = dict(vmem_limit_bytes=int(vmem_budget))

    # ---- fused single-pass path: 2x|x| HBM traffic ----
    fused_bytes = 4 * C * L * itemsize + w_bytes + (1 << 20)  # 2x-in + 2x-out + slack
    if not force_two_pass and fused_bytes <= vmem_budget:
        return pl.pallas_call(
            functools.partial(fused_se_kernel, inv_len=inv_len),
            out_shape=jax.ShapeDtypeStruct((N, C, L), x.dtype),
            grid_spec=pltpu.PrefetchScalarGridSpec(
                num_scalar_prefetch=0,
                grid=(N,),
                in_specs=[
                    pl.BlockSpec((1, C, L), lambda n: (n, 0, 0)),
                    pl.BlockSpec((B, C), lambda n: (0, 0)),
                    pl.BlockSpec((1, B), lambda n: (0, 0)),
                    pl.BlockSpec((C, B), lambda n: (0, 0)),
                    pl.BlockSpec((1, C), lambda n: (0, 0)),
                ],
                out_specs=pl.BlockSpec((1, C, L), lambda n: (n, 0, 0)),
            ),
            compiler_params=pltpu.CompilerParams(
                dimension_semantics=("parallel",), **cparams),
        )(x, w1, b1r, w2, b2r)

    # ---- two-pass streaming path ----
    if l_tile is not None:
        Lt = l_tile
    else:
        Lt = _pick_l_tile(L, C, itemsize, vmem_budget // 2)
    if Lt is None or L % Lt != 0:
        # TODO(synk): an L with no multiple-of-128 divisor that fits VMEM would
        # need masked partial L-tiles; fall back to a single full-L block.
        Lt = L
    nL = L // Lt

    # Pass 1: pooling + excitation MLP in the L-axis finalize.
    # TODO(synk): for v7x small-N inference, a parallel C-tile grid axis would
    # keep both TensorCores streaming during this pass (needs a separate combine).
    s = pl.pallas_call(
        functools.partial(pool_excite_kernel, inv_len=inv_len),
        out_shape=jax.ShapeDtypeStruct((N, C, 1), x.dtype),
        grid_spec=pltpu.PrefetchScalarGridSpec(
            num_scalar_prefetch=0,
            grid=(N, nL),
            in_specs=[
                pl.BlockSpec((1, C, Lt), lambda n, l: (n, 0, l)),
                pl.BlockSpec((B, C), lambda n, l: (0, 0)),
                pl.BlockSpec((1, B), lambda n, l: (0, 0)),
                pl.BlockSpec((C, B), lambda n, l: (0, 0)),
                pl.BlockSpec((1, C), lambda n, l: (0, 0)),
            ],
            out_specs=pl.BlockSpec((1, C, 1), lambda n, l: (n, 0, 0)),
            scratch_shapes=[pltpu.VMEM((1, C, 1), jnp.float32)],
        ),
        compiler_params=pltpu.CompilerParams(
            dimension_semantics=("parallel", "arbitrary"), **cparams),
    )(x, w1, b1r, w2, b2r)

    # Pass 2: stream x once more and scale; fully parallel grid, lane-dense out.
    out = pl.pallas_call(
        scale_kernel,
        out_shape=jax.ShapeDtypeStruct((N, C, L), x.dtype),
        grid_spec=pltpu.PrefetchScalarGridSpec(
            num_scalar_prefetch=0,
            grid=(N, nL),
            in_specs=[
                pl.BlockSpec((1, C, Lt), lambda n, l: (n, 0, l)),
                pl.BlockSpec((1, C, 1), lambda n, l: (n, 0, 0)),
            ],
            out_specs=pl.BlockSpec((1, C, Lt), lambda n, l: (n, 0, l)),
        ),
        compiler_params=pltpu.CompilerParams(
            dimension_semantics=("parallel", "parallel"), **cparams),
    )(x, s)

    return out


def se_module_ref(x, w1, b1, w2, b2):
    """Pure-JAX reference matching the PyTorch forward."""
    pooled = jnp.mean(x, axis=2, keepdims=True)                  # (N, C, 1)
    h = jnp.einsum("bc,nci->nbi", w1, pooled) + b1[None, :, None]
    h = jnp.maximum(h, 0.0)
    s = jnp.einsum("cb,nbi->nci", w2, h) + b2[None, :, None]
    return x * jax.nn.sigmoid(s)


if __name__ == "__main__":
    # Test 1: fused single-pass path at small module-consistent shapes.
    N, C, L, BNECK = 2, 4, 16, 32
    key = jax.random.PRNGKey(0)
    kx, kw1, kb1, kw2, kb2 = jax.random.split(key, 5)

    x = jax.random.normal(kx, (N, C, L), dtype=jnp.float32)
    # Conv1d(C, BNECK, 1) weight (BNECK, C, 1) -> squeezed to (BNECK, C); likewise
    # for the second conv (C, BNECK, 1) -> (C, BNECK).
    w1 = jax.random.normal(kw1, (BNECK, C), dtype=jnp.float32) * 0.1
    b1 = jax.random.normal(kb1, (BNECK,), dtype=jnp.float32) * 0.1
    w2 = jax.random.normal(kw2, (C, BNECK), dtype=jnp.float32) * 0.1
    b2 = jax.random.normal(kb2, (C,), dtype=jnp.float32) * 0.1

    out = jax.block_until_ready(se_module(x, w1, b1, w2, b2))
    ref = se_module_ref(x, w1, b1, w2, b2)
    assert out.shape == (N, C, L), out.shape
    assert jnp.allclose(out, ref, atol=1e-5, rtol=1e-5), "fused path mismatch"

    # Test 2: two-pass streaming path (pool+excite finalize, then scale),
    # forced with a 128-wide L tile so the L-accumulation loop is exercised.
    N2, C2, L2, B2 = 2, 8, 256, 16
    k2 = jax.random.split(jax.random.PRNGKey(0), 5)
    x2 = jax.random.normal(k2[0], (N2, C2, L2), dtype=jnp.float32)
    w1b = jax.random.normal(k2[1], (B2, C2), dtype=jnp.float32) * 0.1
    b1b = jax.random.normal(k2[2], (B2,), dtype=jnp.float32) * 0.1
    w2b = jax.random.normal(k2[3], (C2, B2), dtype=jnp.float32) * 0.1
    b2b = jax.random.normal(k2[4], (C2,), dtype=jnp.float32) * 0.1

    out2 = jax.block_until_ready(
        se_module(x2, w1b, b1b, w2b, b2b, force_two_pass=True, l_tile=128))
    ref2 = se_module_ref(x2, w1b, b1b, w2b, b2b)
    assert out2.shape == (N2, C2, L2), out2.shape
    assert jnp.allclose(out2, ref2, atol=1e-5, rtol=1e-5), "two-pass mismatch"

    print("KERNEL_OK")
</pallas_src>

<mosaic_0001>
module attributes {stable_mosaic.version = 11 : i64} {
  func.func @fused_se_kernel(%arg0: i32, %arg1: memref<1x4x16xf32, #tpu.memory_space<vmem>>, %arg2: memref<32x4xf32, #tpu.memory_space<vmem>>, %arg3: memref<1x32xf32, #tpu.memory_space<vmem>>, %arg4: memref<4x32xf32, #tpu.memory_space<vmem>>, %arg5: memref<1x4xf32, #tpu.memory_space<vmem>>, %arg6: memref<1x4x16xf32, #tpu.memory_space<vmem>>) attributes {dimension_semantics = [#tpu.dimension_semantics<parallel>], iteration_bounds = array<i64: 2>, scalar_prefetch = 0 : i64, scratch_operands = 0 : i64, tpu.core_type = #tpu.core_type<tc>, window_params = [{transform_indices = @transform_0, window_bounds = array<i64: 1, 4, 16>}, {pipeline_mode = #tpu.pipeline_mode<synchronous>, transform_indices = @transform_1, window_bounds = array<i64: 32, 4>}, {pipeline_mode = #tpu.pipeline_mode<synchronous>, transform_indices = @transform_2, window_bounds = array<i64: 1, 32>}, {pipeline_mode = #tpu.pipeline_mode<synchronous>, transform_indices = @transform_3, window_bounds = array<i64: 4, 32>}, {pipeline_mode = #tpu.pipeline_mode<synchronous>, transform_indices = @transform_4, window_bounds = array<i64: 1, 4>}, {transform_indices = @transform_5, window_bounds = array<i64: 1, 4, 16>}]} {
    %c0 = arith.constant 0 : index
    %c0_0 = arith.constant 0 : index
    %c0_1 = arith.constant 0 : index
    %0 = vector.load %arg1[%c0, %c0_0, %c0_1] : memref<1x4x16xf32, #tpu.memory_space<vmem>>, vector<1x4x16xf32>
    %cst = arith.constant dense<0.000000e+00> : vector<1x4xf32>
    %1 = vector.multi_reduction <add>, %0, %cst [2] : vector<1x4x16xf32> to vector<1x4xf32>
    %cst_2 = arith.constant 6.250000e-02 : f32
    %2 = vector.broadcast %cst_2 : f32 to vector<1x4xf32>
    %3 = arith.mulf %1, %2 : vector<1x4xf32>
    %c0_3 = arith.constant 0 : index
    %c0_4 = arith.constant 0 : index
    %4 = vector.load %arg2[%c0_3, %c0_4] : memref<32x4xf32, #tpu.memory_space<vmem>>, vector<32x4xf32>
    %cst_5 = arith.constant dense<0.000000e+00> : vector<1x32xf32>
    %5 = tpu.matmul %3, %4, %cst_5 {dimension_numbers = #tpu.dot_dimension_numbers<[1], [1], [0], [0], [0, 0, 1, 0], [], []>} : vector<1x4xf32>, vector<32x4xf32>, vector<1x32xf32> -> vector<1x32xf32>
    %c0_6 = arith.constant 0 : index
    %c0_7 = arith.constant 0 : index
    %6 = vector.load %arg3[%c0_6, %c0_7] : memref<1x32xf32, #tpu.memory_space<vmem>>, vector<1x32xf32>
    %7 = arith.addf %5, %6 : vector<1x32xf32>
    %cst_8 = arith.constant 0.000000e+00 : f32
    %8 = vector.broadcast %cst_8 : f32 to vector<1x32xf32>
    %9 = arith.maximumf %7, %8 : vector<1x32xf32>
    %c0_9 = arith.constant 0 : index
    %c0_10 = arith.constant 0 : index
    %10 = vector.load %arg4[%c0_9, %c0_10] : memref<4x32xf32, #tpu.memory_space<vmem>>, vector<4x32xf32>
    %cst_11 = arith.constant dense<0.000000e+00> : vector<1x4xf32>
    %11 = tpu.matmul %9, %10, %cst_11 {dimension_numbers = #tpu.dot_dimension_numbers<[1], [1], [0], [0], [0, 0, 1, 0], [], []>} : vector<1x32xf32>, vector<4x32xf32>, vector<1x4xf32> -> vector<1x4xf32>
    %c0_12 = arith.constant 0 : index
    %c0_13 = arith.constant 0 : index
    %12 = vector.load %arg5[%c0_12, %c0_13] : memref<1x4xf32, #tpu.memory_space<vmem>>, vector<1x4xf32>
    %13 = arith.addf %11, %12 : vector<1x4xf32>
    %14 = arith.negf %13 : vector<1x4xf32>
    %15 = math.exp %14 : vector<1x4xf32>
    %cst_14 = arith.constant 1.000000e+00 : f32
    %16 = vector.broadcast %cst_14 : f32 to vector<1x4xf32>
    %17 = arith.addf %16, %15 : vector<1x4xf32>
    %18 = arith.divf %16, %17 : vector<1x4xf32>
    %c0_15 = arith.constant 0 : index
    %c0_16 = arith.constant 0 : index
    %c0_17 = arith.constant 0 : index
    %19 = vector.load %arg1[%c0_15, %c0_16, %c0_17] : memref<1x4x16xf32, #tpu.memory_space<vmem>>, vector<1x4x16xf32>
    %20 = vector.shape_cast %18 : vector<1x4xf32> to vector<1x4x1xf32>
    %21 = vector.broadcast %20 : vector<1x4x1xf32> to vector<1x4x16xf32>
    %22 = arith.mulf %19, %21 : vector<1x4x16xf32>
    %c0_18 = arith.constant 0 : index
    %c0_19 = arith.constant 0 : index
    %c0_20 = arith.constant 0 : index
    %23 = vector.load %arg6[%c0_18, %c0_19, %c0_20] : memref<1x4x16xf32, #tpu.memory_space<vmem>>, vector<1x4x16xf32>
    tpu.vector_store %arg6[%c0_18, %c0_19, %c0_20], %22 {strides = array<i32>} : memref<1x4x16xf32, #tpu.memory_space<vmem>>, vector<1x4x16xf32>,
    return
  }
  func.func @transform_0(%arg0: i32) -> (i32, i32, i32) {
    %c0_i32 = arith.constant 0 : i32
    %c0_i32_0 = arith.constant 0 : i32
    %c0_i32_1 = arith.constant 0 : i32
    return %arg0, %c0_i32, %c0_i32_0 : i32, i32, i32
  }
  func.func @transform_1(%arg0: i32) -> (i32, i32) {
    %c0_i32 = arith.constant 0 : i32
    %c0_i32_0 = arith.constant 0 : i32
    %c0_i32_1 = arith.constant 0 : i32
    return %c0_i32, %c0_i32_0 : i32, i32
  }
  func.func @transform_2(%arg0: i32) -> (i32, i32) {
    %c0_i32 = arith.constant 0 : i32
    %c0_i32_0 = arith.constant 0 : i32
    %c0_i32_1 = arith.constant 0 : i32
    return %c0_i32, %c0_i32_0 : i32, i32
  }
  func.func @transform_3(%arg0: i32) -> (i32, i32) {
    %c0_i32 = arith.constant 0 : i32
    %c0_i32_0 = arith.constant 0 : i32
    %c0_i32_1 = arith.constant 0 : i32
    return %c0_i32, %c0_i32_0 : i32, i32
  }
  func.func @transform_4(%arg0: i32) -> (i32, i32) {
    %c0_i32 = arith.constant 0 : i32
    %c0_i32_0 = arith.constant 0 : i32
    %c0_i32_1 = arith.constant 0 : i32
    return %c0_i32, %c0_i32_0 : i32, i32
  }
  func.func @transform_5(%arg0: i32) -> (i32, i32, i32) {
    %c0_i32 = arith.constant 0 : i32
    %c0_i32_0 = arith.constant 0 : i32
    %c0_i32_1 = arith.constant 0 : i32
    return %arg0, %c0_i32, %c0_i32_0 : i32, i32, i32
  }
}

</mosaic_0001>

<llo_original>
// kernel: tpu_custom_call.1
$region0: #{tpu_custom_call.1}
  #allocation0 [shape = 'u32[]', space=smem, size = 0x4, offset = 0x4, fixed_abs, tag = 'smem constant byte address 0x4 - core index']
  #allocation1 [shape = 'u32[72,128]{1,0:T(1,128)}', space=vmem, size = 0x9000, scoped, tag = 'internal scratch']
  %s0 = inlined_call_operand.vmem [shape: f32[2,4,16], index: 0, kind: input, shape index: {}]
  %s1 = inlined_call_operand.vmem [shape: f32[32,4], index: 1, kind: input, shape index: {}]
  %s2 = inlined_call_operand.vmem [shape: f32[1,32], index: 2, kind: input, shape index: {}]
  %s3 = inlined_call_operand.vmem [shape: f32[4,32], index: 3, kind: input, shape index: {}]
  %s4 = inlined_call_operand.vmem [shape: f32[1,4], index: 4, kind: input, shape index: {}]
  %s5 = inlined_call_operand.hbm [shape: f32[2,4,16], index: 5, kind: output, shape index: {}]
  %s6 = sld [smem:[#allocation0]]
  $region53: #{tpu_custom_call.1} parent=0
    _
  %s8 = ssub.s32 1, %s6
  %s9 = scalar_select 0, %s8, %s6
  $region1: #{tpu_custom_call.1} parent=0
    #allocation2 [shape = 'u8[4096]{0}', space=vmem, size = 0x1000, scoped, tag = 'output window, operand 0']
    #allocation3 [shape = 's32[2]{0}', space=sflag, size = 0x8, scoped, tag = 'scoped memory for tpu_custom_call.1']
    %10 = vsyncpa [#allocation3], 0
    %s11 = scalar_lea.sflag [#allocation3], 1
    %12 = vsyncpa %s11, 0
    loop: start=0, step=1, limit=4
    $region2: #{tpu_custom_call.1} parent=1 // loop_pre_header
      _
    $region3: #{tpu_custom_call.1} parent=1 // loop_header
      %s14 = sphi 0, %s18
      %p15 = scmp.ge.s32.totalorder %s14, 4
      %s24 = sphi 0, %s26
      %s27 = sphi 0, %s24
      %s28 = sphi 0, %s27
      %s44 = sphi 0, %s28
      %s48 = sphi 0, %s48
      %s50 = sphi 0, %s48
      %s51 = sphi 0, %s50
      %s65 = sphi 0, %s51
      %s69 = sphi 0, %s69
      %s71 = sphi 0, %s69
      %s72 = sphi 0, %s71
      %s86 = sphi 0, %s72
      %s90 = sphi 0, %s90
      %s92 = sphi 0, %s90
      %s93 = sphi 0, %s92
      %s107 = sphi 0, %s93
      %s111 = sphi 0, %s111
      %s113 = sphi 0, %s111
      %s114 = sphi 0, %s113
      %s128 = sphi 0, %s114
      %s134 = sphi 0, %s136
      %s137 = sphi 0, %s134
      %s138 = sphi 0, %s137
      %s154 = sphi 0, %s138
    $region4: #{tpu_custom_call.1} parent=1 // loop_header_branch
      %17 = sbr.rel (%p15) target = $region8
    $region5: #{tpu_custom_call.1} parent=1 // loop_body
      %s19 = ssub.s32 %s14, 1
      %s20 = ssub.s32 %s14, 2
      %s21 = sadd.s32 %s14, 1
      %s22 = ssub.s32 %s14, %s21
      %p23 = scmp.eq.s32.totalorder %s22, 0
      %s25 = sadd.s32 %s24, 1
      %s26 = scalar_select %p23, %s24, %s25
      %p29 = pneg %p23
      %p30 = scmp.eq.s32.totalorder %s14, 1
      %p31 = por %p29, %p30
      %p32 = scmp.ne.s32.totalorder %s24, %s27
      %p33 = scmp.eq.s32.totalorder %s14, 0
      %p34 = por %p32, %p33
      %p35 = scmp.ne.s32.totalorder %s24, %s27
      %p36 = scmp.eq.s32.totalorder %s19, 1
      %p37 = por %p35, %p36
      %p38 = scmp.ne.s32.totalorder %s27, %s28
      %p39 = scmp.eq.s32.totalorder %s19, 0
      %p40 = por %p38, %p39
      %p41 = scmp.ne.s32.totalorder %s27, %s28
      %p42 = scmp.eq.s32.totalorder %s20, 1
      %p43 = por %p41, %p42
      %p45 = scmp.ne.s32.totalorder %s28, %s44
      %p46 = scmp.eq.s32.totalorder %s20, 0
      %p47 = por %p45, %p46
      %s49 = sadd.s32 %s48, 1
      %p52 = scmp.eq.s32.totalorder %s14, 1
      %p53 = scmp.ne.s32.totalorder %s48, %s50
      %p54 = scmp.eq.s32.totalorder %s14, 0
      %p55 = por %p53, %p54
      %p56 = scmp.ne.s32.totalorder %s48, %s50
      %p57 = scmp.eq.s32.totalorder %s19, 1
      %p58 = por %p56, %p57
      %p59 = scmp.ne.s32.totalorder %s50, %s51
      %p60 = scmp.eq.s32.totalorder %s19, 0
      %p61 = por %p59, %p60
      %p62 = scmp.ne.s32.totalorder %s50, %s51
      %p63 = scmp.eq.s32.totalorder %s20, 1
      %p64 = por %p62, %p63
      %p66 = scmp.ne.s32.totalorder %s51, %s65
      %p67 = scmp.eq.s32.totalorder %s20, 0
      %p68 = por %p66, %p67
      %s70 = sadd.s32 %s69, 1
      %p73 = scmp.eq.s32.totalorder %s14, 1
      %p74 = scmp.ne.s32.totalorder %s69, %s71
      %p75 = scmp.eq.s32.totalorder %s14, 0
      %p76 = por %p74, %p75
      %p77 = scmp.ne.s32.totalorder %s69, %s71
      %p78 = scmp.eq.s32.totalorder %s19, 1
      %p79 = por %p77, %p78
      %p80 = scmp.ne.s32.totalorder %s71, %s72
      %p81 = scmp.eq.s32.totalorder %s19, 0
      %p82 = por %p80, %p81
      %p83 = scmp.ne.s32.totalorder %s71, %s72
      %p84 = scmp.eq.s32.totalorder %s20, 1
      %p85 = por %p83, %p84
      %p87 = scmp.ne.s32.totalorder %s72, %s86
      %p88 = scmp.eq.s32.totalorder %s20, 0
      %p89 = por %p87, %p88
      %s91 = sadd.s32 %s90, 1
      %p94 = scmp.eq.s32.totalorder %s14, 1
      %p95 = scmp.ne.s32.totalorder %s90, %s92
      %p96 = scmp.eq.s32.totalorder %s14, 0
      %p97 = por %p95, %p96
      %p98 = scmp.ne.s32.totalorder %s90, %s92
      %p99 = scmp.eq.s32.totalorder %s19, 1
      %p100 = por %p98, %p99
      %p101 = scmp.ne.s32.totalorder %s92, %s93
      %p102 = scmp.eq.s32.totalorder %s19, 0
      %p103 = por %p101, %p102
      %p104 = scmp.ne.s32.totalorder %s92, %s93
      %p105 = scmp.eq.s32.totalorder %s20, 1
      %p106 = por %p104, %p105
      %p108 = scmp.ne.s32.totalorder %s93, %s107
      %p109 = scmp.eq.s32.totalorder %s20, 0
      %p110 = por %p108, %p109
      %s112 = sadd.s32 %s111, 1
      %p115 = scmp.eq.s32.totalorder %s14, 1
      %p116 = scmp.ne.s32.totalorder %s111, %s113
      %p117 = scmp.eq.s32.totalorder %s14, 0
      %p118 = por %p116, %p117
      %p119 = scmp.ne.s32.totalorder %s111, %s113
      %p120 = scmp.eq.s32.totalorder %s19, 1
      %p121 = por %p119, %p120
      %p122 = scmp.ne.s32.totalorder %s113, %s114
      %p123 = scmp.eq.s32.totalorder %s19, 0
      %p124 = por %p122, %p123
      %p125 = scmp.ne.s32.totalorder %s113, %s114
      %p126 = scmp.eq.s32.totalorder %s20, 1
      %p127 = por %p125, %p126
      %p129 = scmp.ne.s32.totalorder %s114, %s128
      %p130 = scmp.eq.s32.totalorder %s20, 0
      %p131 = por %p129, %p130
      %s132 = ssub.s32 %s14, %s21
      %p133 = scmp.eq.s32.totalorder %s132, 0
      %s135 = sadd.s32 %s134, 1
      %s136 = scalar_select %p133, %s134, %s135
      %p139 = pneg %p133
      %p140 = scmp.eq.s32.totalorder %s14, 1
      %p141 = por %p139, %p140
      %p142 = scmp.ne.s32.totalorder %s134, %s137
      %p143 = scmp.eq.s32.totalorder %s14, 0
      %p144 = por %p142, %p143
      %p145 = scmp.ne.s32.totalorder %s134, %s137
      %p146 = scmp.eq.s32.totalorder %s19, 1
      %p147 = por %p145, %p146
      %p148 = scmp.ne.s32.totalorder %s137, %s138
      %p149 = scmp.eq.s32.totalorder %s19, 0
      %p150 = por %p148, %p149
      %p151 = scmp.ne.s32.totalorder %s137, %s138
      %p152 = scmp.eq.s32.totalorder %s20, 1
      %p153 = por %p151, %p152
      %p155 = scmp.ne.s32.totalorder %s138, %s154
      %p156 = scmp.eq.s32.totalorder %s20, 0
      %p157 = por %p155, %p156
      %p158 = scmp.le.s32.totalorder 1, %s14
      %p159 = scmp.lt.s32.totalorder %s14, 3
      %p160 = pnand %p158, %p159
      %p161 = pneg %p160
      // Predicated region
      $region9: #{tpu_custom_call.1} parent=5 // pred_check
        _
      $region10: #{tpu_custom_call.1} parent=5 // pred_check_branch
        %163 = sbr.rel (%p160) target = $region12
      $region11: #{tpu_custom_call.1} parent=5 // pred_region
        %s164 = ssub.s32 %s14, 1
        // Predicated region
        $region13: #{tpu_custom_call.1} parent=11 // pred_check
          %p165 = pneg %p61
        $region14: #{tpu_custom_call.1} parent=11 // pred_check_branch
          %167 = sbr.rel (%p165) target = $region16
        $region15: #{tpu_custom_call.1} parent=11 // pred_region
          _
        $region16: #{tpu_custom_call.1} parent=11 // pred_fallthru
          _
        // Predicated region
        $region17: #{tpu_custom_call.1} parent=11 // pred_check
          %p168 = pneg %p82
        $region18: #{tpu_custom_call.1} parent=11 // pred_check_branch
          %170 = sbr.rel (%p168) target = $region20
        $region19: #{tpu_custom_call.1} parent=11 // pred_region
          _
        $region20: #{tpu_custom_call.1} parent=11 // pred_fallthru
          _
        // Predicated region
        $region21: #{tpu_custom_call.1} parent=11 // pred_check
          %p171 = pneg %p103
        $region22: #{tpu_custom_call.1} parent=11 // pred_check_branch
          %173 = sbr.rel (%p171) target = $region24
        $region23: #{tpu_custom_call.1} parent=11 // pred_region
          _
        $region24: #{tpu_custom_call.1} parent=11 // pred_fallthru
          _
        // Predicated region
        $region25: #{tpu_custom_call.1} parent=11 // pred_check
          %p174 = pneg %p124
        $region26: #{tpu_custom_call.1} parent=11 // pred_check_branch
          %176 = sbr.rel (%p174) target = $region28
        $region27: #{tpu_custom_call.1} parent=11 // pred_region
          _
        $region28: #{tpu_custom_call.1} parent=11 // pred_fallthru
          _
      $region12: #{tpu_custom_call.1} parent=5 // pred_fallthru
        _
      %p177 = scmp.lt.s32.totalorder %s14, 2
      // Predicated region
      $region29: #{tpu_custom_call.1} parent=5 // pred_check
        %p178 = pneg %p177
      $region30: #{tpu_custom_call.1} parent=5 // pred_check_branch
        %180 = sbr.rel (%p178) target = $region32
      $region31: #{tpu_custom_call.1} parent=5 // pred_region
        // Predicated region
        $region33: #{tpu_custom_call.1} parent=31 // pred_check
          %p181 = pneg %p34
        $region34: #{tpu_custom_call.1} parent=31 // pred_check_branch
          %183 = sbr.rel (%p181) target = $region36
        $region35: #{tpu_custom_call.1} parent=31 // pred_region
          %p184 = scmp.lt.s32.totalorder %s14, 1
          %s185 = scalar_select %p184, %s14, 1
          %s186 = smul.addr %s185, 4
          %s187 = scalar_lea.vmem %s0, %s186
        $region36: #{tpu_custom_call.1} parent=31 // pred_fallthru
          _
      $region32: #{tpu_custom_call.1} parent=5 // pred_fallthru
        _
      %p188 = scmp.le.s32.totalorder 1, %s14
      %p189 = scmp.lt.s32.totalorder %s14, 3
      %p190 = pnand %p188, %p189
      %p191 = pneg %p190
      // Predicated region
      $region37: #{tpu_custom_call.1} parent=5 // pred_check
        _
      $region38: #{tpu_custom_call.1} parent=5 // pred_check_branch
        %193 = sbr.rel (%p190) target = $region40
      $region39: #{tpu_custom_call.1} parent=5 // pred_region
        %s194 = ssub.s32 %s14, 1
        %p195 = scmp.lt.s32.totalorder %s19, 1
        %s196 = scalar_select %p195, %s19, 1
        %s197 = smul.addr %s196, 4
        %s198 = scalar_lea.vmem %s0, %s197
        %p199 = pneg %p40
        %p200 = pneg %p37
        %p201 = pneg %p61
        %p202 = pneg %p58
        %p203 = pneg %p82
        %p204 = pneg %p79
        %p205 = pneg %p103
        %p206 = pneg %p100
        %p207 = pneg %p124
        %p208 = pneg %p121
        %p209 = pneg %p150
        %p210 = pneg %p147
        %s211 = sand.u32 %s137, 1
        %s212 = scalar_lea.sflag [#allocation3], %s211
        %s213 = sand.u32 %s137, 1
        %s214 = smul.addr %s213, 4
        %s215 = scalar_lea.vmem [#allocation2], %s214
        %p216 = scmp.lt.s32.totalorder %s19, 1
        %s217 = scalar_select %p216, %s19, 1
        %s218 = smul.addr %s217, 4
        %s219 = scalar_lea.vmem %s0, %s218
        %v220 = vld [vmem:[%s219] sm:$0xf]
        %vm221 = vcmask 125952
        %v222 = vsel %vm221, %v220, 0.0
        %223 = vadd.xlane.f32.xlu0 %v222
        %v224 = vpop.xlane.xlu0 %223
        %v225 = vmul.f32 %v224, 0.0625
        %v226 = vld [vmem:[%s1] sm:$0xff]
        %v227 = vld [vmem:[%s1 + $0x8] sm:$0xff]
        %v228 = vld [vmem:[%s1 + $0x10] sm:$0xff]
        %v229 = vld [vmem:[%s1 + $0x18] sm:$0xff]
        %v230 = vld [vmem:[%s2] sm:$0x1]
        %v232 = vlaneseq
        %v233 = vand.u32 %v232, 127
        %v234 = vperm.slane %v225, %v233
        %vm235 = vcmask 31744
        %v236 = vsel %vm235, %v234, 0
        %v239 = vsel %vm235, %v226, 0
        %v242 = vsel %vm235, %v227, 0
        %v245 = vsel %vm235, %v228, 0
        %v248 = vsel %vm235, %v229, 0
        %250 = vmatpush.xpose.msra.mxu0 0.0
        %251 = vmatpush.xpose.msra.mxu0 0.0
        %252 = vmatpush.xpose.msra.mxu0 0.0
        %253 = vmatpush.xpose.msra.mxu0 0.0
        %254 = vmatpush.xpose.msra.mxu0 0.0
        %255 = vmatpush.xpose.msra.mxu0 0.0
        %256 = vmatpush.xpose.msra.mxu0 0.0
        %257 = vmatpush.xpose.msra.mxu0 0.0
        %258 = vmatpush.xpose.msra.mxu0 0.0
        %259 = vmatpush.xpose.msra.mxu0 0.0
        %260 = vmatpush.xpose.msra.mxu0 0.0
        %261 = vmatpush.xpose.msra.mxu0 0.0
        %262 = vmatpush.xpose.msra.mxu0 %v248
        %263 = vmatpush.xpose.msra.mxu0 %v245
        %264 = vmatpush.xpose.msra.mxu0 %v242
        %265 = vmatpush.xpose.msra.mxu0 %v239
        %266 = vmatmul.f32.gmra.mxu0 %v236
        %v267 = vpop.f32.mrf.mxu0
        %v268 = vadd.f32 %v230, %v267
        %269 = vdwg.mxu0
        %v270 = vmax.f32 %v268, 0.0
        %v271 = vld [vmem:[%s3] sm:$0xf]
        %v272 = vld [vmem:[%s4] sm:$0x1]
        %vm273 = vcmask 261120
        %v275 = vsel %vm273, %v270, 0
        %v278 = vsel %vm273, %v271, 0
        %280 = vmatpush.xpose.msra.mxu0 0.0
        %281 = vmatpush.xpose.msra.mxu0 0.0
        %282 = vmatpush.xpose.msra.mxu0 0.0
        %283 = vmatpush.xpose.msra.mxu0 0.0
        %284 = vmatpush.xpose.msra.mxu0 0.0
        %285 = vmatpush.xpose.msra.mxu0 0.0
        %286 = vmatpush.xpose.msra.mxu0 0.0
        %287 = vmatpush.xpose.msra.mxu0 0.0
        %288 = vmatpush.xpose.msra.mxu0 0.0
        %289 = vmatpush.xpose.msra.mxu0 0.0
        %290 = vmatpush.xpose.msra.mxu0 0.0
        %291 = vmatpush.xpose.msra.mxu0 0.0
        %292 = vmatpush.xpose.msra.mxu0 0.0
        %293 = vmatpush.xpose.msra.mxu0 0.0
        %294 = vmatpush.xpose.msra.mxu0 0.0
        %295 = vmatpush.xpose.msra.mxu0 %v278
        %296 = vmatmul.f32.gmra.mxu0 %v275
        %v297 = vpop.f32.mrf.mxu0
        %v298 = vadd.f32 %v272, %v297
        %299 = vdwg.mxu0
        %v300 = vxor.u32 %v298, 2147483648
        %v301 = vmul.f32 %v300, 1.442695
        %v302 = vpow.pop %v301
        %v303 = vadd.f32 %v302, 1.0
        %v304 = vrcp.pop %v303
        %v305 = vmul.f32 %v303, %v304
        %v306 = vsub.f32 1.0, %v305
        %v307 = vmul.f32 %v304, %v306
        %v308 = vadd.f32 %v304, %v307
        %vm309 = vweird.f32 %v303
        %vm310 = vweird.f32 %v304
        %vm311 = vmor %vm309, %vm310
        %v312 = vsel %vm311, %v304, %v308
        %v313 = vand.u32 2147483647, %v303
        %vm314 = vcmp.eq.f32.partialorder %v313, 8.507059e+37
        %v315 = vand.u32 %v303, 2147483648
        %v316 = vor.u32 1.1754944e-38, %v315
        %v317 = vsel %vm314, %v316, %v312
        %v318 = vmul.f32 1.0, %v317
        %v319 = vperm.slane %v318, 0
        %v320 = vlaneseq
        %v321 = vshrl.u32 %v320, 7
        %323 = vset.pattern.permute.xlu0 %v321
        %324 = vperm.xlu0 %323, %v319
        %v325 = vpop.permute.xlu0 %324
        %v326 = vmul.f32 %v220, %v325
        %327 = vst.msk [vmem:[%s215] sm:$0xf] %vm221, %v326
        %s328 = sand.u32 %s137, 1
        %s329 = scalar_lea.sflag [#allocation3], %s328
        %s330 = sand.u32 %s137, 1
        %s331 = smul.addr %s330, 4
        %s332 = scalar_lea.vmem [#allocation2], %s331
        // Predicated region
        $region41: #{tpu_custom_call.1} parent=39 // pred_check
          %p333 = pneg %p147
        $region42: #{tpu_custom_call.1} parent=39 // pred_check_branch
          %335 = sbr.rel (%p333) target = $region44
        $region43: #{tpu_custom_call.1} parent=39 // pred_region
          %337 = vsyncadd %s329, 0
          %s338 = smul.addr %s19, 4
          %s339 = scalar_lea.hbm %s5, %s338
          %s341 = sshll.u32 %s332, 4
          %s342 = int_to_ptr.vmem [resolvable:$true] %s341
          %s343 = sshll.u32 %s339, 4
          %s344 = int_to_ptr.hbm [resolvable:$true] %s343
          %346 = dma.vmem_to_hbm [thread:$0]  %s342, 64, %s344, %s329
        $region44: #{tpu_custom_call.1} parent=39 // pred_fallthru
          _
      $region40: #{tpu_custom_call.1} parent=5 // pred_fallthru
        _
      %p347 = scmp.le.s32.totalorder 2, %s14
      // Predicated region
      $region45: #{tpu_custom_call.1} parent=5 // pred_check
        %p348 = pneg %p347
      $region46: #{tpu_custom_call.1} parent=5 // pred_check_branch
        %350 = sbr.rel (%p348) target = $region48
      $region47: #{tpu_custom_call.1} parent=5 // pred_region
        %s351 = ssub.s32 %s14, 2
        // Predicated region
        $region49: #{tpu_custom_call.1} parent=47 // pred_check
          %p352 = pneg %p153
        $region50: #{tpu_custom_call.1} parent=47 // pred_check_branch
          %354 = sbr.rel (%p352) target = $region52
        $region51: #{tpu_custom_call.1} parent=47 // pred_region
          %s355 = sand.u32 %s138, 1
          %s356 = scalar_lea.sflag [#allocation3], %s355
          %s357 = sand.u32 %s138, 1
          %s358 = smul.addr %s357, 4
          %s359 = scalar_lea.vmem [#allocation2], %s358
          %361 = dma.done %s356, 64
        $region52: #{tpu_custom_call.1} parent=47 // pred_fallthru
          _
      $region48: #{tpu_custom_call.1} parent=5 // pred_fallthru
        _
    $region6: #{tpu_custom_call.1} parent=1 // loop_footer
      %s18 = sadd.s32 1, %s14
    $region7: #{tpu_custom_call.1} parent=1 // loop_footer_branch
      %13 = sbr.rel target = $region3
    $region8: #{tpu_custom_call.1} parent=1 // loop_exit
      _
    %362 = vsyncpa [#allocation3], 1
    %s363 = scalar_lea.sflag [#allocation3], 1
    %364 = vsyncpa %s363, 1

</llo_original>
